<compile_context>
chip_gen: v6e
topology: v6e:2x2x1
jax: 0.10.0
libtpu: 0.0.40
codegen_flags: <defaults>
</compile_context>

<pallas_src>
import math

import jax
import jax.numpy as jnp
from jax.experimental import pallas as pl
from jax.experimental.pallas import tpu as pltpu


def _round_up(n: int, m: int) -> int:
    return ((n + m - 1) // m) * m


def _sub_kernel(x_ref, o_ref):
    # x_ref: (TILE_R, D)  natural-layout rows
    # o_ref: (TILE_R, 2)  = x[..., 2:4] - x[..., 0:2]
    o_ref[...] = x_ref[:, 2:4] - x_ref[:, 0:2]


# Per-step VMEM budget: double-buffered input (lanes padded to 128s) plus
# double-buffered output (2 -> 128 padded lanes).  8 MiB is safe on every
# generation (v5e 16 MiB default scoped, v6e 32 MiB, v7x 64 MiB physical).
_VMEM_BUDGET_BYTES = 8 * 1024 * 1024
_TARGET_BLOCKS = 8  # enough steps to pipeline; even -> balanced v7x megacore split


def warped_forward(x):
    """Pallas TPU implementation of  x[..., 2:4] - x[..., 0:2]  (any D >= 4)."""
    D = x.shape[-1]
    if D < 4:
        raise ValueError("last dim must be >= 4")
    lead = x.shape[:-1]
    R = max(math.prod(lead), 1)
    itemsize = jnp.dtype(x.dtype).itemsize

    x2d = x.reshape(R, D)  # collapse leading dims: metadata-only, no HBM copy
    if D > 128:
        # Very wide rows: pre-slice to the 4 needed columns so the kernel block
        # (and its lane-padded VMEM footprint) stays small.  One narrow copy.
        x2d = x2d[:, :4]
        D_eff = 4
    else:
        D_eff = D

    # ---- tile / grid geometry --------------------------------------------
    in_lanes = _round_up(D_eff, 128)
    bytes_per_row = 2 * (in_lanes + 128) * max(itemsize, 4)  # dbl-buffered in+out
    tile_cap = max((_VMEM_BUDGET_BYTES // bytes_per_row) // 8 * 8, 8)

    if R <= 8:
        tile_r = R  # block == full row dim (allowed for any R); grid = (1,)
    else:
        tile_r = min(_round_up(pl.cdiv(R, _TARGET_BLOCKS), 8), tile_cap)
        nblocks = pl.cdiv(R, tile_r)
        if nblocks > 1 and nblocks % 2 == 1:
            # Best effort: even block count for the v7x 2-TensorCore split.
            tile_r2 = min(_round_up(pl.cdiv(R, nblocks + 1), 8), tile_cap)
            if pl.cdiv(R, tile_r2) % 2 == 0:
                tile_r = tile_r2
    grid = (pl.cdiv(R, tile_r),)  # ragged last block is masked by Pallas

    out2d = pl.pallas_call(
        _sub_kernel,
        out_shape=jax.ShapeDtypeStruct((R, 2), x.dtype),
        grid=grid,
        in_specs=[pl.BlockSpec((tile_r, D_eff), lambda i: (i, 0))],
        out_specs=pl.BlockSpec((tile_r, 2), lambda i: (i, 0)),
        compiler_params=pltpu.CompilerParams(
            dimension_semantics=("parallel",),  # v7x: shard blocks over 2 TCs
        ),
        cost_estimate=pl.CostEstimate(
            flops=2 * R,
            bytes_accessed=R * (D_eff + 2) * itemsize,
            transcendentals=0,
        ),
    )(x2d)

    return out2d.reshape(*lead, 2)  # metadata-only un-flatten


if __name__ == "__main__":
    key = jax.random.PRNGKey(0)
    # Small shapes consistent with the module's forward (any [..., D >= 4]).
    B, N, D = 2, 128, 8
    x = jax.random.normal(key, (B, N, D), dtype=jnp.float32)

    out = jax.block_until_ready(warped_forward(x))
    ref = x[..., 2:4] - x[..., 0:2]
    assert out.shape == ref.shape == (B, N, 2)
    assert jnp.allclose(out, ref), "mismatch vs reference"

    # Non-aligned rows + D > 4 (exercises the ragged final block path).
    x2 = jax.random.normal(jax.random.PRNGKey(1), (3, 50, 5), dtype=jnp.float32)
    out2 = jax.block_until_ready(warped_forward(x2))
    assert jnp.allclose(out2, x2[..., 2:4] - x2[..., 0:2]), "mismatch (ragged)"

    # D == 4 exactly, 2-D input (metadata-only flatten/unflatten path).
    x3 = jax.random.normal(jax.random.PRNGKey(2), (64, 4), dtype=jnp.float32)
    out3 = jax.block_until_ready(warped_forward(x3))
    assert jnp.allclose(out3, x3[..., 2:4] - x3[..., 0:2]), "mismatch (D=4)"

    print("KERNEL_OK")
</pallas_src>

<mosaic_0001>
module attributes {stable_mosaic.version = 11 : i64} {
  func.func @_sub_kernel(%arg0: i32, %arg1: memref<32x8xf32, #tpu.memory_space<vmem>>, %arg2: memref<32x2xf32, #tpu.memory_space<vmem>>) attributes {dimension_semantics = [#tpu.dimension_semantics<parallel>], iteration_bounds = array<i64: 8>, scalar_prefetch = 0 : i64, scratch_operands = 0 : i64, tpu.core_type = #tpu.core_type<tc>, window_params = [{transform_indices = @transform_0, window_bounds = array<i64: 32, 8>}, {transform_indices = @transform_1, window_bounds = array<i64: 32, 2>}]} {
    %c0 = arith.constant 0 : index
    %c2 = arith.constant 2 : index
    %0 = vector.load %arg1[%c0, %c2] : memref<32x8xf32, #tpu.memory_space<vmem>>, vector<32x2xf32>
    %c0_0 = arith.constant 0 : index
    %c0_1 = arith.constant 0 : index
    %1 = vector.load %arg1[%c0_0, %c0_1] : memref<32x8xf32, #tpu.memory_space<vmem>>, vector<32x2xf32>
    %2 = arith.subf %0, %1 : vector<32x2xf32>
    %c0_2 = arith.constant 0 : index
    %c0_3 = arith.constant 0 : index
    %3 = vector.load %arg2[%c0_2, %c0_3] : memref<32x2xf32, #tpu.memory_space<vmem>>, vector<32x2xf32>
    tpu.vector_store %arg2[%c0_2, %c0_3], %2 {strides = array<i32>} : memref<32x2xf32, #tpu.memory_space<vmem>>, vector<32x2xf32>,
    return
  }
  func.func @transform_0(%arg0: i32) -> (i32, i32) {
    %c0_i32 = arith.constant 0 : i32
    %c0_i32_0 = arith.constant 0 : i32
    return %arg0, %c0_i32 : i32, i32
  }
  func.func @transform_1(%arg0: i32) -> (i32, i32) {
    %c0_i32 = arith.constant 0 : i32
    %c0_i32_0 = arith.constant 0 : i32
    return %arg0, %c0_i32 : i32, i32
  }
}

</mosaic_0001>

<llo_original>
// kernel: tpu_custom_call.1
$region0: #{tpu_custom_call.1}
  #allocation0 [shape = 'u32[]', space=smem, size = 0x4, offset = 0x4, fixed_abs, tag = 'smem constant byte address 0x4 - core index']
  #allocation1 [shape = 'u32[144,128]{1,0:T(1,128)}', space=vmem, size = 0x12000, scoped, tag = 'internal scratch']
  %s0 = inlined_call_operand.vmem [shape: f32[256,8], index: 0, kind: input, shape index: {}]
  %s1 = inlined_call_operand.vmem [shape: f32[256,2], index: 1, kind: output, shape index: {}]
  %s2 = sld [smem:[#allocation0]]
  $region37: #{tpu_custom_call.1} parent=0
    _
  %s4 = ssub.s32 1, %s2
  %s5 = scalar_select 0, %s4, %s2
  loop: start=0, step=1, limit=10
  $region2: #{tpu_custom_call.1} parent=0 // loop_pre_header
    _
  $region3: #{tpu_custom_call.1} parent=0 // loop_header
    %s7 = sphi 0, %s11
    %p8 = scmp.ge.s32.totalorder %s7, 10
    %s17 = sphi 0, %s19
    %s20 = sphi 0, %s17
    %s21 = sphi 0, %s20
    %s37 = sphi 0, %s21
    %s43 = sphi 0, %s45
    %s46 = sphi 0, %s43
    %s47 = sphi 0, %s46
    %s63 = sphi 0, %s47
  $region4: #{tpu_custom_call.1} parent=0 // loop_header_branch
    %10 = sbr.rel (%p8) target = $region8
  $region5: #{tpu_custom_call.1} parent=0 // loop_body
    %s12 = ssub.s32 %s7, 1
    %s13 = ssub.s32 %s7, 2
    %s14 = sadd.s32 %s7, 1
    %s15 = ssub.s32 %s7, %s14
    %p16 = scmp.eq.s32.totalorder %s15, 0
    %s18 = sadd.s32 %s17, 1
    %s19 = scalar_select %p16, %s17, %s18
    %p22 = pneg %p16
    %p23 = scmp.eq.s32.totalorder %s7, 7
    %p24 = por %p22, %p23
    %p25 = scmp.ne.s32.totalorder %s17, %s20
    %p26 = scmp.eq.s32.totalorder %s7, 0
    %p27 = por %p25, %p26
    %p28 = scmp.ne.s32.totalorder %s17, %s20
    %p29 = scmp.eq.s32.totalorder %s12, 7
    %p30 = por %p28, %p29
    %p31 = scmp.ne.s32.totalorder %s20, %s21
    %p32 = scmp.eq.s32.totalorder %s12, 0
    %p33 = por %p31, %p32
    %p34 = scmp.ne.s32.totalorder %s20, %s21
    %p35 = scmp.eq.s32.totalorder %s13, 7
    %p36 = por %p34, %p35
    %p38 = scmp.ne.s32.totalorder %s21, %s37
    %p39 = scmp.eq.s32.totalorder %s13, 0
    %p40 = por %p38, %p39
    %s41 = ssub.s32 %s7, %s14
    %p42 = scmp.eq.s32.totalorder %s41, 0
    %s44 = sadd.s32 %s43, 1
    %s45 = scalar_select %p42, %s43, %s44
    %p48 = pneg %p42
    %p49 = scmp.eq.s32.totalorder %s7, 7
    %p50 = por %p48, %p49
    %p51 = scmp.ne.s32.totalorder %s43, %s46
    %p52 = scmp.eq.s32.totalorder %s7, 0
    %p53 = por %p51, %p52
    %p54 = scmp.ne.s32.totalorder %s43, %s46
    %p55 = scmp.eq.s32.totalorder %s12, 7
    %p56 = por %p54, %p55
    %p57 = scmp.ne.s32.totalorder %s46, %s47
    %p58 = scmp.eq.s32.totalorder %s12, 0
    %p59 = por %p57, %p58
    %p60 = scmp.ne.s32.totalorder %s46, %s47
    %p61 = scmp.eq.s32.totalorder %s13, 7
    %p62 = por %p60, %p61
    %p64 = scmp.ne.s32.totalorder %s47, %s63
    %p65 = scmp.eq.s32.totalorder %s13, 0
    %p66 = por %p64, %p65
    %p67 = scmp.le.s32.totalorder 1, %s7
    %p68 = scmp.lt.s32.totalorder %s7, 9
    %p69 = pnand %p67, %p68
    %p70 = pneg %p69
    // Predicated region
    $region9: #{tpu_custom_call.1} parent=5 // pred_check
      _
    $region10: #{tpu_custom_call.1} parent=5 // pred_check_branch
      %72 = sbr.rel (%p69) target = $region12
    $region11: #{tpu_custom_call.1} parent=5 // pred_region
      %s73 = ssub.s32 %s7, 1
    $region12: #{tpu_custom_call.1} parent=5 // pred_fallthru
      _
    %p74 = scmp.lt.s32.totalorder %s7, 8
    // Predicated region
    $region13: #{tpu_custom_call.1} parent=5 // pred_check
      %p75 = pneg %p74
    $region14: #{tpu_custom_call.1} parent=5 // pred_check_branch
      %77 = sbr.rel (%p75) target = $region16
    $region15: #{tpu_custom_call.1} parent=5 // pred_region
      // Predicated region
      $region17: #{tpu_custom_call.1} parent=15 // pred_check
        %p78 = pneg %p27
      $region18: #{tpu_custom_call.1} parent=15 // pred_check_branch
        %80 = sbr.rel (%p78) target = $region20
      $region19: #{tpu_custom_call.1} parent=15 // pred_region
        %s81 = smul.u32 4, %s7
        %p82 = scmp.lt.s32.totalorder %s81, 31
        %s83 = scalar_select %p82, %s81, 31
        %s84 = smul.addr %s83, 8
        %s85 = scalar_lea.vmem %s0, %s84
        %s86 = smul.u32 4, %s7
      $region20: #{tpu_custom_call.1} parent=15 // pred_fallthru
        _
    $region16: #{tpu_custom_call.1} parent=5 // pred_fallthru
      _
    %p87 = scmp.le.s32.totalorder 1, %s7
    %p88 = scmp.lt.s32.totalorder %s7, 9
    %p89 = pnand %p87, %p88
    %p90 = pneg %p89
    // Predicated region
    $region21: #{tpu_custom_call.1} parent=5 // pred_check
      _
    $region22: #{tpu_custom_call.1} parent=5 // pred_check_branch
      %92 = sbr.rel (%p89) target = $region24
    $region23: #{tpu_custom_call.1} parent=5 // pred_region
      %s93 = ssub.s32 %s7, 1
      %s94 = smul.u32 4, %s12
      %p95 = scmp.lt.s32.totalorder %s94, 31
      %s96 = scalar_select %p95, %s94, 31
      %s97 = smul.addr %s96, 8
      %s98 = scalar_lea.vmem %s0, %s97
      %p99 = pneg %p33
      %p100 = pneg %p30
      %p101 = pneg %p59
      %p102 = pneg %p56
      %s103 = smul.u32 4, %s12
      %p104 = scmp.lt.s32.totalorder %s103, 31
      %s105 = scalar_select %p104, %s103, 31
      %s106 = smul.addr %s105, 8
      %s107 = scalar_lea.vmem %s1, %s106
      %s108 = smul.u32 4, %s12
      %p109 = scmp.lt.s32.totalorder %s108, 31
      %s110 = scalar_select %p109, %s108, 31
      %s111 = smul.addr %s110, 8
      %s112 = scalar_lea.vmem %s0, %s111
      %s113 = smul.u32 4, %s12
      %s114 = smul.u32 4, %s12
      %p115 = scmp.lt.s32.totalorder %s114, 31
      %s116 = scalar_select %p115, %s114, 31
      %s117 = smul.addr %s116, 8
      %s118 = scalar_lea.vmem %s1, %s117
      %s119 = smul.u32 4, %s12
      %v120 = vld [vmem:[%s112] sm:$0xff]
      %v121 = vld [vmem:[%s112 + $0x8] sm:$0xff]
      %v122 = vld [vmem:[%s112 + $0x10] sm:$0xff]
      %v123 = vld [vmem:[%s112 + $0x18] sm:$0xff]
      %128 = vrot.lane.b32.xlu0 %v120, 2
      %v129 = vpop.permute.xlu0 %128
      %130 = vrot.lane.b32.xlu0 %v121, 2
      %v131 = vpop.permute.xlu0 %130
      %132 = vrot.lane.b32.xlu0 %v122, 2
      %v133 = vpop.permute.xlu0 %132
      %134 = vrot.lane.b32.xlu0 %v123, 2
      %v135 = vpop.permute.xlu0 %134
      %v140 = vsub.f32 %v120, %v129
      %v141 = vsub.f32 %v121, %v131
      %v142 = vsub.f32 %v122, %v133
      %v143 = vsub.f32 %v123, %v135
      %148 = vrot.lane.b32.xlu0 %v140, 126
      %v149 = vpop.permute.xlu0 %148
      %150 = vrot.lane.b32.xlu0 %v141, 126
      %v151 = vpop.permute.xlu0 %150
      %152 = vrot.lane.b32.xlu0 %v142, 126
      %v153 = vpop.permute.xlu0 %152
      %154 = vrot.lane.b32.xlu0 %v143, 126
      %v155 = vpop.permute.xlu0 %154
      %vm160 = vcmask 15360
      %161 = vst.msk [vmem:[%s118] sm:$0xff] %vm160, %v149
      %162 = vst.msk [vmem:[%s118 + $0x8] sm:$0xff] %vm160, %v151
      %163 = vst.msk [vmem:[%s118 + $0x10] sm:$0xff] %vm160, %v153
      %164 = vst.msk [vmem:[%s118 + $0x18] sm:$0xff] %vm160, %v155
      %s165 = smul.u32 4, %s12
      %p166 = scmp.lt.s32.totalorder %s165, 31
      %s167 = scalar_select %p166, %s165, 31
      %s168 = smul.addr %s167, 8
      %s169 = scalar_lea.vmem %s1, %s168
      // Predicated region
      $region25: #{tpu_custom_call.1} parent=23 // pred_check
        %p170 = pneg %p56
      $region26: #{tpu_custom_call.1} parent=23 // pred_check_branch
        %172 = sbr.rel (%p170) target = $region28
      $region27: #{tpu_custom_call.1} parent=23 // pred_region
        %s173 = smul.u32 4, %s12
      $region28: #{tpu_custom_call.1} parent=23 // pred_fallthru
        _
    $region24: #{tpu_custom_call.1} parent=5 // pred_fallthru
      _
    %p174 = scmp.le.s32.totalorder 2, %s7
    // Predicated region
    $region29: #{tpu_custom_call.1} parent=5 // pred_check
      %p175 = pneg %p174
    $region30: #{tpu_custom_call.1} parent=5 // pred_check_branch
      %177 = sbr.rel (%p175) target = $region32
    $region31: #{tpu_custom_call.1} parent=5 // pred_region
      %s178 = ssub.s32 %s7, 2
      // Predicated region
      $region33: #{tpu_custom_call.1} parent=31 // pred_check
        %p179 = pneg %p62
      $region34: #{tpu_custom_call.1} parent=31 // pred_check_branch
        %181 = sbr.rel (%p179) target = $region36
      $region35: #{tpu_custom_call.1} parent=31 // pred_region
        %s182 = smul.u32 4, %s13
        %p183 = scmp.lt.s32.totalorder %s182, 31
        %s184 = scalar_select %p183, %s182, 31
        %s185 = smul.addr %s184, 8
        %s186 = scalar_lea.vmem %s1, %s185
      $region36: #{tpu_custom_call.1} parent=31 // pred_fallthru
        _
    $region32: #{tpu_custom_call.1} parent=5 // pred_fallthru
      _
  $region6: #{tpu_custom_call.1} parent=0 // loop_footer
    %s11 = sadd.s32 1, %s7
  $region7: #{tpu_custom_call.1} parent=0 // loop_footer_branch
    %6 = sbr.rel target = $region3
  $region8: #{tpu_custom_call.1} parent=0 // loop_exit
    _

</llo_original>
